<compile_context>
chip_gen: v7x
topology: tpu7x:2x2x1
jax: 0.10.0
libtpu: 0.0.40
codegen_flags: <defaults>
</compile_context>

<pallas_src>
import functools

import jax
import jax.numpy as jnp
from jax.experimental import pallas as pl
from jax.experimental.pallas import tpu as pltpu

_LANE = 128
_TARGET_BLOCK_BYTES = 2 * 1024 * 1024  # per array per grid step


def _round_up(x, m):
    return ((x + m - 1) // m) * m


def _vmem_limit_bytes():
    # Leave headroom below physical VMEM (64 MiB on v7x, 128 MiB on v5e/v6e).
    try:
        cap = pltpu.get_tpu_info().vmem_capacity_bytes
        return int(min(100 * 1024 * 1024, cap * 3 // 4))
    except Exception:
        return 48 * 1024 * 1024  # safe on every generation


# ---------------------------------------------------------------------------
# Kernels
# ---------------------------------------------------------------------------

def _l1_elem_kernel(p_ref, t_ref, o_ref, *, scale):
    d = jnp.abs(p_ref[...] - t_ref[...])
    if scale != 1.0:
        d = d * jnp.asarray(scale, d.dtype)
    o_ref[...] = d.astype(o_ref.dtype)


def _l1_elem_w_kernel(p_ref, t_ref, w_ref, o_ref, *, scale):
    d = jnp.abs(p_ref[...] - t_ref[...]) * w_ref[...]
    if scale != 1.0:
        d = d * jnp.asarray(scale, d.dtype)
    o_ref[...] = d.astype(o_ref.dtype)


def _l1_reduce_kernel(p_ref, t_ref, lsum_ref, lacc):
    # Unweighted per-(sample, channel) partial sums of |p - t|.
    # Refs are (N, tk, 128); accumulator stays lane-wide (N, 128).
    k = pl.program_id(1)

    @pl.when(k == 0)
    def _():
        lacc[...] = jnp.zeros_like(lacc)

    p = p_ref[...].astype(jnp.float32)
    t = t_ref[...].astype(jnp.float32)
    lacc[...] += jnp.sum(jnp.abs(p - t), axis=1)            # (N, 128)

    @pl.when(k == pl.num_programs(1) - 1)
    def _():
        lsum_ref[...] = lacc[...]                            # lane-dense store


def _l1_reduce_w_kernel(p_ref, t_ref, w_ref, lsum_ref, wsum_ref, lacc, wacc):
    # Weighted per-(sample, channel) partial sums of |p - t| * w and of w.
    k = pl.program_id(1)

    @pl.when(k == 0)
    def _():
        lacc[...] = jnp.zeros_like(lacc)
        wacc[...] = jnp.zeros_like(wacc)

    p = p_ref[...].astype(jnp.float32)
    t = t_ref[...].astype(jnp.float32)
    w = w_ref[...].astype(jnp.float32)
    lacc[...] += jnp.sum(jnp.abs(p - t) * w, axis=1)         # (N, 128)
    wacc[...] += jnp.sum(w, axis=1)

    @pl.when(k == pl.num_programs(1) - 1)
    def _():
        lsum_ref[...] = lacc[...]
        wsum_ref[...] = wacc[...]


# ---------------------------------------------------------------------------
# pallas_call wrappers
# ---------------------------------------------------------------------------

def _make_specs(n, tk, w_c_is_one):
    data_spec = pl.BlockSpec((n, None, tk, _LANE), lambda c, k: (0, c, k, 0))
    if w_c_is_one:
        # weight has C == 1: reuse the same weight block for every channel
        # instead of materializing a C-times-larger broadcast in HBM.
        w_spec = pl.BlockSpec((n, None, tk, _LANE), lambda c, k: (0, 0, k, 0))
    else:
        w_spec = data_spec
    return data_spec, w_spec


def _elementwise_l1(p4, t4, w4, w_c_is_one, tk, scale, out_dtype):
    n, c, rp, _ = p4.shape
    grid = (c, rp // tk)
    data_spec, w_spec = _make_specs(n, tk, w_c_is_one)
    if w4 is None:
        kernel = functools.partial(_l1_elem_kernel, scale=scale)
        inputs = (p4, t4)
        in_specs = [data_spec, data_spec]
    else:
        kernel = functools.partial(_l1_elem_w_kernel, scale=scale)
        inputs = (p4, t4, w4)
        in_specs = [data_spec, data_spec, w_spec]
    return pl.pallas_call(
        kernel,
        out_shape=jax.ShapeDtypeStruct((n, c, rp, _LANE), out_dtype),
        grid_spec=pltpu.PrefetchScalarGridSpec(
            num_scalar_prefetch=0, grid=grid,
            in_specs=in_specs, out_specs=data_spec),
        compiler_params=pltpu.CompilerParams(
            dimension_semantics=("parallel", "parallel"),
            vmem_limit_bytes=_vmem_limit_bytes()),
    )(*inputs)


def _per_sample_channel_sums(p4, t4, w4, w_c_is_one, tk):
    """Returns lane-wide partial sums of shape (N, C*128) (loss, and weight)."""
    n, c, rp, _ = p4.shape
    grid = (c, rp // tk)
    data_spec, w_spec = _make_specs(n, tk, w_c_is_one)
    out_spec = pl.BlockSpec((n, _LANE), lambda cc, kk: (0, cc))
    cparams = pltpu.CompilerParams(
        dimension_semantics=("parallel", "arbitrary"),
        vmem_limit_bytes=_vmem_limit_bytes())

    if w4 is None:
        lsum = pl.pallas_call(
            _l1_reduce_kernel,
            out_shape=jax.ShapeDtypeStruct((n, c * _LANE), jnp.float32),
            grid_spec=pltpu.PrefetchScalarGridSpec(
                num_scalar_prefetch=0, grid=grid,
                in_specs=[data_spec, data_spec],
                out_specs=out_spec,
                scratch_shapes=[pltpu.VMEM((n, _LANE), jnp.float32)]),
            compiler_params=cparams,
        )(p4, t4)
        return lsum, None

    lsum, wsum = pl.pallas_call(
        _l1_reduce_w_kernel,
        out_shape=(jax.ShapeDtypeStruct((n, c * _LANE), jnp.float32),
                   jax.ShapeDtypeStruct((n, c * _LANE), jnp.float32)),
        grid_spec=pltpu.PrefetchScalarGridSpec(
            num_scalar_prefetch=0, grid=grid,
            in_specs=[data_spec, data_spec, w_spec],
            out_specs=(out_spec, out_spec),
            scratch_shapes=[pltpu.VMEM((n, _LANE), jnp.float32),
                            pltpu.VMEM((n, _LANE), jnp.float32)]),
        compiler_params=cparams,
    )(p4, t4, w4)
    return lsum, wsum


# ---------------------------------------------------------------------------
# Public wrapper (mirrors L1Loss.forward)
# ---------------------------------------------------------------------------

def l1_loss_pallas(pred, target, weight=None, reduction='mean',
                   sample_wise=False, loss_weight=1.0):
    """Reproduces L1Loss.forward: loss_weight * l1_loss(pred, target, weight, ...)."""
    if reduction not in ('none', 'mean', 'sum'):
        raise ValueError(f'Unsupported reduction mode: {reduction}')

    n, c, h, w = pred.shape
    hw = h * w
    itemsize = pred.dtype.itemsize

    wc = None
    w_c_is_one = False
    if weight is not None:
        wc = weight.shape[1]
        assert wc == 1 or wc == c
        w_c_is_one = (wc == 1) and (c > 1)

    # lane-dense layout: per-(sample, channel) rows of 128 lanes, padded.
    r = _round_up(hw, _LANE) // _LANE
    tk = _TARGET_BLOCK_BYTES // max(1, n * _LANE * itemsize)
    tk = max(8, (tk // 8) * 8)
    tk = min(tk, _round_up(r, 8))
    rp = _round_up(r, tk)
    # TODO(synk): for very large batch sizes also block over N instead of
    # keeping the full batch in every block.

    def to_layout(x, ch):
        x = x.reshape(n, ch, hw)
        pad = rp * _LANE - hw
        if pad:
            x = jnp.pad(x, ((0, 0), (0, 0), (0, pad)))
        return x.reshape(n, ch, rp, _LANE)

    p4 = to_layout(pred, c)
    t4 = to_layout(target, c)
    w4 = None
    if weight is not None:
        w4 = to_layout(weight, 1 if wc == 1 else c)

    if reduction == 'none':
        out4 = _elementwise_l1(p4, t4, w4, w_c_is_one, tk,
                               float(loss_weight), pred.dtype)
        out = out4.reshape(n, c, rp * _LANE)[:, :, :hw].reshape(n, c, h, w)
        return out

    # 'mean' / 'sum': per-(sample, channel) partial sums computed in-kernel.
    lsum_lanes, wsum_lanes = _per_sample_channel_sums(p4, t4, w4, w_c_is_one, tk)
    lsum_n = jnp.sum(lsum_lanes, axis=1)          # (N,) per-sample loss sums
    total_l = jnp.sum(lsum_n)

    eps = 1e-12
    if weight is None:
        if reduction == 'mean':
            result = total_l / (n * c * h * w)
        else:  # 'sum'
            result = total_l
    else:
        if reduction == 'sum':
            result = total_l
        else:  # 'mean' with weight
            wsum_n = jnp.sum(wsum_lanes, axis=1)  # (N,) per-sample weight sums
            if sample_wise:
                result = jnp.sum(lsum_n / (wsum_n + eps)) / n
            else:
                result = total_l / (jnp.sum(wsum_n) + eps)

    return (loss_weight * result).astype(pred.dtype)


# ---------------------------------------------------------------------------
# Demo
# ---------------------------------------------------------------------------

if __name__ == "__main__":
    key = jax.random.PRNGKey(0)
    k1, k2, k3, k4 = jax.random.split(key, 4)

    N, C, H, W = 2, 4, 16, 16
    pred = jax.random.normal(k1, (N, C, H, W), dtype=jnp.float32)
    target = jax.random.normal(k2, (N, C, H, W), dtype=jnp.float32)
    weight = (jax.random.uniform(k3, (N, C, H, W)) > 0.5).astype(jnp.float32)
    weight_c1 = (jax.random.uniform(k4, (N, 1, H, W)) > 0.3).astype(jnp.float32)

    out_mean = l1_loss_pallas(pred, target, weight=None, reduction='mean')
    out_mean_w = l1_loss_pallas(pred, target, weight=weight, reduction='mean')
    out_sum = l1_loss_pallas(pred, target, weight=weight, reduction='sum')
    out_none = l1_loss_pallas(pred, target, weight=weight, reduction='none')
    out_none_lw = l1_loss_pallas(pred, target, reduction='none', loss_weight=0.5)
    out_sw = l1_loss_pallas(pred, target, weight=weight, reduction='mean',
                            sample_wise=True)
    out_c1 = l1_loss_pallas(pred, target, weight=weight_c1, reduction='mean')

    jax.block_until_ready(
        (out_mean, out_mean_w, out_sum, out_none, out_none_lw, out_sw, out_c1))

    # lightweight correctness checks against plain JAX references
    eps = 1e-12
    ref_elem = jnp.abs(pred - target)
    assert jnp.allclose(out_mean, jnp.mean(ref_elem), rtol=1e-5, atol=1e-6)
    assert jnp.allclose(out_mean_w,
                        jnp.sum(ref_elem * weight) / (jnp.sum(weight) + eps),
                        rtol=1e-5, atol=1e-6)
    assert jnp.allclose(out_sum, jnp.sum(ref_elem * weight), rtol=1e-5, atol=1e-4)
    assert jnp.allclose(out_none, ref_elem * weight, rtol=1e-5, atol=1e-6)
    assert jnp.allclose(out_none_lw, 0.5 * ref_elem, rtol=1e-5, atol=1e-6)
    wps = jnp.sum(weight, axis=(1, 2, 3), keepdims=True)
    ref_sw = jnp.sum((ref_elem * weight) / (wps + eps)) / N
    assert jnp.allclose(out_sw, ref_sw, rtol=1e-5, atol=1e-6)
    wb = jnp.broadcast_to(weight_c1, pred.shape)
    assert jnp.allclose(out_c1,
                        jnp.sum(ref_elem * wb) / (jnp.sum(wb) + eps),
                        rtol=1e-5, atol=1e-6)

    print("KERNEL_OK")
</pallas_src>

<mosaic_0001>
module attributes {stable_mosaic.version = 11 : i64} {
  func.func @_l1_reduce_kernel(%arg0: i32, %arg1: i32, %arg2: memref<2x1x8x128xf32, #tpu.memory_space<vmem>>, %arg3: memref<2x1x8x128xf32, #tpu.memory_space<vmem>>, %arg4: memref<2x128xf32, #tpu.memory_space<vmem>>, %arg5: memref<2x128xf32, #tpu.memory_space<vmem>>) attributes {dimension_semantics = [#tpu.dimension_semantics<parallel>, #tpu.dimension_semantics<arbitrary>], iteration_bounds = array<i64: 4, 1>, scalar_prefetch = 0 : i64, scratch_operands = 1 : i64, tpu.core_type = #tpu.core_type<tc>, window_params = [{transform_indices = @transform_0, window_bounds = array<i64: 2, 1, 8, 128>}, {transform_indices = @transform_1, window_bounds = array<i64: 2, 1, 8, 128>}, {transform_indices = @transform_2, window_bounds = array<i64: 2, 128>}]} {
    %c0_i32 = arith.constant 0 : i32
    %0 = arith.cmpi eq, %arg1, %c0_i32 : i32
    %1 = arith.extui %0 : i1 to i32
    %c0_i32_0 = arith.constant 0 : i32
    %2 = arith.cmpi ne, %1, %c0_i32_0 : i32
    scf.if %2 {
      %cst_14 = arith.constant 0.000000e+00 : f32
      %16 = vector.broadcast %cst_14 : f32 to vector<2x128xf32>
      %c0_15 = arith.constant 0 : index
      %c0_16 = arith.constant 0 : index
      %17 = vector.load %arg5[%c0_15, %c0_16] : memref<2x128xf32, #tpu.memory_space<vmem>>, vector<2x128xf32>
      tpu.vector_store %arg5[%c0_15, %c0_16], %16 {strides = array<i32>} : memref<2x128xf32, #tpu.memory_space<vmem>>, vector<2x128xf32>,
    } else {
    }
    %c0 = arith.constant 0 : index
    %c0_1 = arith.constant 0 : index
    %c0_2 = arith.constant 0 : index
    %c0_3 = arith.constant 0 : index
    %3 = vector.load %arg2[%c0, %c0_1, %c0_2, %c0_3] : memref<2x1x8x128xf32, #tpu.memory_space<vmem>>, vector<2x1x8x128xf32>
    %4 = vector.shape_cast %3 : vector<2x1x8x128xf32> to vector<2x8x128xf32>
    %c0_4 = arith.constant 0 : index
    %c0_5 = arith.constant 0 : index
    %c0_6 = arith.constant 0 : index
    %c0_7 = arith.constant 0 : index
    %5 = vector.load %arg3[%c0_4, %c0_5, %c0_6, %c0_7] : memref<2x1x8x128xf32, #tpu.memory_space<vmem>>, vector<2x1x8x128xf32>
    %6 = vector.shape_cast %5 : vector<2x1x8x128xf32> to vector<2x8x128xf32>
    %c0_8 = arith.constant 0 : index
    %c0_9 = arith.constant 0 : index
    %7 = vector.load %arg5[%c0_8, %c0_9] : memref<2x128xf32, #tpu.memory_space<vmem>>, vector<2x128xf32>
    %8 = arith.subf %4, %6 : vector<2x8x128xf32>
    %9 = math.absf %8 : vector<2x8x128xf32>
    %cst = arith.constant dense<0.000000e+00> : vector<2x128xf32>
    %10 = vector.multi_reduction <add>, %9, %cst [1] : vector<2x8x128xf32> to vector<2x128xf32>
    %11 = arith.addf %7, %10 : vector<2x128xf32>
    %c0_10 = arith.constant 0 : index
    %c0_11 = arith.constant 0 : index
    %12 = vector.load %arg5[%c0_10, %c0_11] : memref<2x128xf32, #tpu.memory_space<vmem>>, vector<2x128xf32>
    tpu.vector_store %arg5[%c0_10, %c0_11], %11 {strides = array<i32>} : memref<2x128xf32, #tpu.memory_space<vmem>>, vector<2x128xf32>,
    %c0_i32_12 = arith.constant 0 : i32
    %13 = arith.cmpi eq, %arg1, %c0_i32_12 : i32
    %14 = arith.extui %13 : i1 to i32
    %c0_i32_13 = arith.constant 0 : i32
    %15 = arith.cmpi ne, %14, %c0_i32_13 : i32
    scf.if %15 {
      %c0_14 = arith.constant 0 : index
      %c0_15 = arith.constant 0 : index
      %16 = vector.load %arg5[%c0_14, %c0_15] : memref<2x128xf32, #tpu.memory_space<vmem>>, vector<2x128xf32>
      %c0_16 = arith.constant 0 : index
      %c0_17 = arith.constant 0 : index
      %17 = vector.load %arg4[%c0_16, %c0_17] : memref<2x128xf32, #tpu.memory_space<vmem>>, vector<2x128xf32>
      tpu.vector_store %arg4[%c0_16, %c0_17], %16 {strides = array<i32>} : memref<2x128xf32, #tpu.memory_space<vmem>>, vector<2x128xf32>,
    } else {
    }
    return
  }
  func.func @transform_0(%arg0: i32, %arg1: i32) -> (i32, i32, i32, i32) {
    %c0_i32 = arith.constant 0 : i32
    %c0_i32_0 = arith.constant 0 : i32
    %c0_i32_1 = arith.constant 0 : i32
    return %c0_i32, %arg0, %arg1, %c0_i32_0 : i32, i32, i32, i32
  }
  func.func @transform_1(%arg0: i32, %arg1: i32) -> (i32, i32, i32, i32) {
    %c0_i32 = arith.constant 0 : i32
    %c0_i32_0 = arith.constant 0 : i32
    %c0_i32_1 = arith.constant 0 : i32
    return %c0_i32, %arg0, %arg1, %c0_i32_0 : i32, i32, i32, i32
  }
  func.func @transform_2(%arg0: i32, %arg1: i32) -> (i32, i32) {
    %c0_i32 = arith.constant 0 : i32
    %c0_i32_0 = arith.constant 0 : i32
    return %c0_i32, %arg0 : i32, i32
  }
}

</mosaic_0001>

<llo_original>
// kernel: tpu_custom_call.1
$region0: #{tpu_custom_call.1}
  #allocation0 [shape = 'u32[]', space=smem, size = 0x4, offset = 0x4, fixed_abs, tag = 'smem constant byte address 0x4 - core index']
  #allocation1 [shape = 'u32[144,128]{1,0:T(1,128)}', space=vmem, size = 0x12000, scoped, tag = 'internal scratch']
  #allocation2 [shape = 'f32[2,128]{1,0:T(2,128)}', space=vmem, size = 0x400, scoped, tag = 'scratch operand']
  %s0 = inlined_call_operand.hbm [shape: f32[2,4,8,128], index: 0, kind: input, shape index: {}]
  %s1 = inlined_call_operand.hbm [shape: f32[2,4,8,128], index: 1, kind: input, shape index: {}]
  %s2 = inlined_call_operand.hbm [shape: f32[2,512], index: 2, kind: output, shape index: {}]
  %s3 = sld [smem:[#allocation0]]
  $region57: #{tpu_custom_call.1} parent=0
    _
  %s5 = ssub.s32 1, %s3
  %s6 = scalar_select 0, %s5, %s3
  $region1: #{tpu_custom_call.1} parent=0
    #allocation3 [shape = 'u8[16384]{0}', space=vmem, size = 0x4000, scoped, tag = 'input window, operand 0']
    #allocation4 [shape = 's32[2]{0}', space=sflag, size = 0x8, scoped, tag = 'scoped memory for tpu_custom_call.1']
    #allocation5 [shape = 's32[2]{0}', space=sflag, size = 0x8, scoped, tag = 'scoped memory for tpu_custom_call.1']
    #allocation6 [shape = 'u8[16384]{0}', space=vmem, size = 0x4000, scoped, tag = 'input window, operand 1']
    #allocation7 [shape = 's32[2]{0}', space=sflag, size = 0x8, scoped, tag = 'scoped memory for tpu_custom_call.1']
    #allocation8 [shape = 'u8[2048]{0}', space=vmem, size = 0x800, scoped, tag = 'output window, operand 0']
    %7 = vsyncpa [#allocation4], 0
    %s8 = scalar_lea.sflag [#allocation4], 1
    %9 = vsyncpa %s8, 0
    %10 = vsyncpa [#allocation7], 0
    %s11 = scalar_lea.sflag [#allocation7], 1
    %12 = vsyncpa %s11, 0
    %13 = vsyncpa [#allocation5], 0
    %s14 = scalar_lea.sflag [#allocation5], 1
    %15 = vsyncpa %s14, 0
    loop: start=0, step=1, limit=6
    $region2: #{tpu_custom_call.1} parent=1 // loop_pre_header
      _
    $region3: #{tpu_custom_call.1} parent=1 // loop_header
      %s17 = sphi 0, %s21
      %p18 = scmp.ge.s32.totalorder %s17, 6
      %s24 = sphi 0, %s36
      %s25 = sphi 0, %s32
      %s26 = sphi 0, %s24
      %s27 = sphi 0, %s25
      %s28 = sphi 0, %s26
      %s29 = sphi 0, %s27
      %s41 = sphi 0, %s43
      %s44 = sphi 0, %s41
      %s45 = sphi 0, %s44
      %s61 = sphi 0, %s45
      %s69 = sphi 0, %s71
      %s72 = sphi 0, %s69
      %s73 = sphi 0, %s72
      %s89 = sphi 0, %s73
      %s95 = sphi 0, %s97
      %s98 = sphi 0, %s95
      %s99 = sphi 0, %s98
      %s115 = sphi 0, %s99
    $region4: #{tpu_custom_call.1} parent=1 // loop_header_branch
      %20 = sbr.rel (%p18) target = $region8
    $region5: #{tpu_custom_call.1} parent=1 // loop_body
      %s22 = ssub.s32 %s17, 1
      %s23 = ssub.s32 %s17, 2
      %s30 = sadd.s32 1, %s25
      %p31 = scmp.ge.s32.totalorder %s30, 1
      %s32 = scalar_select %p31, 0, %s30
      %s33 = sadd.s32 1, %s24
      %s34 = scalar_select %p31, %s33, %s24
      %p35 = scmp.ge.s32.totalorder %s34, 4
      %s36 = scalar_select %p35, 0, %s34
      %s37 = ssub.s32 %s24, %s36
      %s38 = ssub.s32 %s25, %s32
      %s39 = sor.u32 %s37, %s38
      %p40 = scmp.eq.s32.totalorder %s39, 0
      %s42 = sadd.s32 %s41, 1
      %s43 = scalar_select %p40, %s41, %s42
      %p46 = pneg %p40
      %p47 = scmp.eq.s32.totalorder %s17, 3
      %p48 = por %p46, %p47
      %p49 = scmp.ne.s32.totalorder %s41, %s44
      %p50 = scmp.eq.s32.totalorder %s17, 0
      %p51 = por %p49, %p50
      %p52 = scmp.ne.s32.totalorder %s41, %s44
      %p53 = scmp.eq.s32.totalorder %s22, 3
      %p54 = por %p52, %p53
      %p55 = scmp.ne.s32.totalorder %s44, %s45
      %p56 = scmp.eq.s32.totalorder %s22, 0
      %p57 = por %p55, %p56
      %p58 = scmp.ne.s32.totalorder %s44, %s45
      %p59 = scmp.eq.s32.totalorder %s23, 3
      %p60 = por %p58, %p59
      %p62 = scmp.ne.s32.totalorder %s45, %s61
      %p63 = scmp.eq.s32.totalorder %s23, 0
      %p64 = por %p62, %p63
      %s65 = ssub.s32 %s24, %s36
      %s66 = ssub.s32 %s25, %s32
      %s67 = sor.u32 %s65, %s66
      %p68 = scmp.eq.s32.totalorder %s67, 0
      %s70 = sadd.s32 %s69, 1
      %s71 = scalar_select %p68, %s69, %s70
      %p74 = pneg %p68
      %p75 = scmp.eq.s32.totalorder %s17, 3
      %p76 = por %p74, %p75
      %p77 = scmp.ne.s32.totalorder %s69, %s72
      %p78 = scmp.eq.s32.totalorder %s17, 0
      %p79 = por %p77, %p78
      %p80 = scmp.ne.s32.totalorder %s69, %s72
      %p81 = scmp.eq.s32.totalorder %s22, 3
      %p82 = por %p80, %p81
      %p83 = scmp.ne.s32.totalorder %s72, %s73
      %p84 = scmp.eq.s32.totalorder %s22, 0
      %p85 = por %p83, %p84
      %p86 = scmp.ne.s32.totalorder %s72, %s73
      %p87 = scmp.eq.s32.totalorder %s23, 3
      %p88 = por %p86, %p87
      %p90 = scmp.ne.s32.totalorder %s73, %s89
      %p91 = scmp.eq.s32.totalorder %s23, 0
      %p92 = por %p90, %p91
      %s93 = ssub.s32 %s24, %s36
      %p94 = scmp.eq.s32.totalorder %s93, 0
      %s96 = sadd.s32 %s95, 1
      %s97 = scalar_select %p94, %s95, %s96
      %p100 = pneg %p94
      %p101 = scmp.eq.s32.totalorder %s17, 3
      %p102 = por %p100, %p101
      %p103 = scmp.ne.s32.totalorder %s95, %s98
      %p104 = scmp.eq.s32.totalorder %s17, 0
      %p105 = por %p103, %p104
      %p106 = scmp.ne.s32.totalorder %s95, %s98
      %p107 = scmp.eq.s32.totalorder %s22, 3
      %p108 = por %p106, %p107
      %p109 = scmp.ne.s32.totalorder %s98, %s99
      %p110 = scmp.eq.s32.totalorder %s22, 0
      %p111 = por %p109, %p110
      %p112 = scmp.ne.s32.totalorder %s98, %s99
      %p113 = scmp.eq.s32.totalorder %s23, 3
      %p114 = por %p112, %p113
      %p116 = scmp.ne.s32.totalorder %s99, %s115
      %p117 = scmp.eq.s32.totalorder %s23, 0
      %p118 = por %p116, %p117
      %p119 = scmp.le.s32.totalorder 1, %s17
      %p120 = scmp.lt.s32.totalorder %s17, 5
      %p121 = pnand %p119, %p120
      %p122 = pneg %p121
      // Predicated region
      $region9: #{tpu_custom_call.1} parent=5 // pred_check
        _
      $region10: #{tpu_custom_call.1} parent=5 // pred_check_branch
        %124 = sbr.rel (%p121) target = $region12
      $region11: #{tpu_custom_call.1} parent=5 // pred_region
        %s125 = ssub.s32 %s17, 1
      $region12: #{tpu_custom_call.1} parent=5 // pred_fallthru
        _
      %p126 = scmp.lt.s32.totalorder %s17, 4
      // Predicated region
      $region13: #{tpu_custom_call.1} parent=5 // pred_check
        %p127 = pneg %p126
      $region14: #{tpu_custom_call.1} parent=5 // pred_check_branch
        %129 = sbr.rel (%p127) target = $region16
      $region15: #{tpu_custom_call.1} parent=5 // pred_region
        // Predicated region
        $region17: #{tpu_custom_call.1} parent=15 // pred_check
          %p130 = pneg %p51
        $region18: #{tpu_custom_call.1} parent=15 // pred_check_branch
          %132 = sbr.rel (%p130) target = $region20
        $region19: #{tpu_custom_call.1} parent=15 // pred_region
          %s133 = sand.u32 %s41, 1
          %s134 = scalar_lea.sflag [#allocation4], %s133
          %s135 = sand.u32 %s41, 1
          %s136 = smul.addr %s135, 16
          %s137 = scalar_lea.vmem [#allocation3], %s136
          %s139 = ssub.s32 256, 256
          %140 = vsyncadd %s134, %s139
          %s141 = sadd.s32 %s25, %s24
          %s142 = smul.addr %s141, 128
          %s143 = scalar_lea.hbm %s0, %s142
          %s144 = sshll.u32 %s137, 4
          %s145 = int_to_ptr.vmem [resolvable:$true] %s144
          %150 = dma.hbm_to_vmem [thread:$0]  %s143, 256, %s145, %s134, 512, 128, 8
        $region20: #{tpu_custom_call.1} parent=15 // pred_fallthru
          _
        // Predicated region
        $region21: #{tpu_custom_call.1} parent=15 // pred_check
          %p151 = pneg %p79
        $region22: #{tpu_custom_call.1} parent=15 // pred_check_branch
          %153 = sbr.rel (%p151) target = $region24
        $region23: #{tpu_custom_call.1} parent=15 // pred_region
          %s154 = sand.u32 %s69, 1
          %s155 = scalar_lea.sflag [#allocation7], %s154
          %s156 = sand.u32 %s69, 1
          %s157 = smul.addr %s156, 16
          %s158 = scalar_lea.vmem [#allocation6], %s157
          %s160 = ssub.s32 256, 256
          %161 = vsyncadd %s155, %s160
          %s162 = sadd.s32 %s25, %s24
          %s163 = smul.addr %s162, 128
          %s164 = scalar_lea.hbm %s1, %s163
          %s165 = sshll.u32 %s158, 4
          %s166 = int_to_ptr.vmem [resolvable:$true] %s165
          %171 = dma.hbm_to_vmem [thread:$0]  %s164, 256, %s166, %s155, 512, 128, 8
        $region24: #{tpu_custom_call.1} parent=15 // pred_fallthru
          _
      $region16: #{tpu_custom_call.1} parent=5 // pred_fallthru
        _
      %p172 = scmp.le.s32.totalorder 1, %s17
      %p173 = scmp.lt.s32.totalorder %s17, 5
      %p174 = pnand %p172, %p173
      %p175 = pneg %p174
      // Predicated region
      $region25: #{tpu_custom_call.1} parent=5 // pred_check
        _
      $region26: #{tpu_custom_call.1} parent=5 // pred_check_branch
        %177 = sbr.rel (%p174) target = $region28
      $region27: #{tpu_custom_call.1} parent=5 // pred_region
        %s178 = ssub.s32 %s17, 1
        %s179 = sand.u32 %s44, 1
        %s180 = scalar_lea.sflag [#allocation4], %s179
        %s181 = sand.u32 %s44, 1
        %s182 = smul.addr %s181, 16
        %s183 = scalar_lea.vmem [#allocation3], %s182
        // Predicated region
        $region29: #{tpu_custom_call.1} parent=27 // pred_check
          %p184 = pneg %p57
        $region30: #{tpu_custom_call.1} parent=27 // pred_check_branch
          %186 = sbr.rel (%p184) target = $region32
        $region31: #{tpu_custom_call.1} parent=27 // pred_region
          %187 = dma.done %s180, 256
        $region32: #{tpu_custom_call.1} parent=27 // pred_fallthru
          _
        %s188 = sand.u32 %s72, 1
        %s189 = scalar_lea.sflag [#allocation7], %s188
        %s190 = sand.u32 %s72, 1
        %s191 = smul.addr %s190, 16
        %s192 = scalar_lea.vmem [#allocation6], %s191
        // Predicated region
        $region33: #{tpu_custom_call.1} parent=27 // pred_check
          %p193 = pneg %p85
        $region34: #{tpu_custom_call.1} parent=27 // pred_check_branch
          %195 = sbr.rel (%p193) target = $region36
        $region35: #{tpu_custom_call.1} parent=27 // pred_region
          %196 = dma.done %s189, 256
        $region36: #{tpu_custom_call.1} parent=27 // pred_fallthru
          _
        %s197 = sand.u32 %s44, 1
        %s198 = scalar_lea.sflag [#allocation4], %s197
        %s199 = sand.u32 %s44, 1
        %s200 = smul.addr %s199, 16
        %s201 = scalar_lea.vmem [#allocation3], %s200
        %p202 = pneg %p57
        %p203 = pneg %p54
        %s204 = sand.u32 %s72, 1
        %s205 = scalar_lea.sflag [#allocation7], %s204
        %s206 = sand.u32 %s72, 1
        %s207 = smul.addr %s206, 16
        %s208 = scalar_lea.vmem [#allocation6], %s207
        %p209 = pneg %p85
        %p210 = pneg %p82
        %p211 = pneg %p111
        %p212 = pneg %p108
        %s213 = sand.u32 %s98, 1
        %s214 = scalar_lea.sflag [#allocation5], %s213
        %s215 = sand.u32 %s98, 1
        %s216 = smul.addr %s215, 2
        %s217 = scalar_lea.vmem [#allocation8], %s216
        %p218 = scmp.eq.s32.totalorder %s27, 0
        // Predicated region
        $region37: #{tpu_custom_call.1} parent=27 // pred_check
          %p219 = pneg %p218
        $region38: #{tpu_custom_call.1} parent=27 // pred_check_branch
          %221 = sbr.rel (%p219) target = $region40
        $region39: #{tpu_custom_call.1} parent=27 // pred_region
          %222 = vst [vmem:[#allocation2] sm:$0x3] 0.0
        $region40: #{tpu_custom_call.1} parent=27 // pred_fallthru
          _
        %v223 = vld [vmem:[%s183] sm:$0xff]
        %v224 = vld [vmem:[%s183 + $0x8] sm:$0xff]
        %v225 = vld [vmem:[%s192] sm:$0xff]
        %v226 = vld [vmem:[%s192 + $0x8] sm:$0xff]
        %v227 = vld [vmem:[#allocation2] sm:$0x3]
        %v228 = vsub.f32 %v223, %v225
        %v229 = vsub.f32 %v224, %v226
        %v230 = vand.u32 2147483647, %v228
        %v231 = vand.u32 2147483647, %v229
        %v232 = vrot.slane %v230, 4
        %v233 = vadd.f32 %v230, %v232
        %v234 = vrot.slane %v233, 2
        %v235 = vadd.f32 %v233, %v234
        %v236 = vrot.slane %v235, 1
        %v237 = vadd.f32 %v235, %v236
        %v238 = vrot.slane %v231, 4
        %v239 = vadd.f32 %v231, %v238
        %v240 = vrot.slane %v239, 2
        %v241 = vadd.f32 %v239, %v240
        %v242 = vrot.slane %v241, 1
        %v243 = vadd.f32 %v241, %v242
        %vm246 = vcmask 1041409
        %v247 = vsel %vm246, %v243, %v237
        %v249 = vadd.f32 %v227, %v247
        %250 = vst [vmem:[#allocation2] sm:$0x3] %v249
        // Predicated region
        $region41: #{tpu_custom_call.1} parent=27 // pred_check
          %p251 = pneg %p218
        $region42: #{tpu_custom_call.1} parent=27 // pred_check_branch
          %253 = sbr.rel (%p251) target = $region44
        $region43: #{tpu_custom_call.1} parent=27 // pred_region
          %v254 = vld [vmem:[#allocation2] sm:$0x3]
          %255 = vst [vmem:[%s217] sm:$0x3] %v254
        $region44: #{tpu_custom_call.1} parent=27 // pred_fallthru
          _
        %s256 = sand.u32 %s98, 1
        %s257 = scalar_lea.sflag [#allocation5], %s256
        %s258 = sand.u32 %s98, 1
        %s259 = smul.addr %s258, 2
        %s260 = scalar_lea.vmem [#allocation8], %s259
        // Predicated region
        $region45: #{tpu_custom_call.1} parent=27 // pred_check
          %p261 = pneg %p108
        $region46: #{tpu_custom_call.1} parent=27 // pred_check_branch
          %263 = sbr.rel (%p261) target = $region48
        $region47: #{tpu_custom_call.1} parent=27 // pred_region
          %s265 = ssub.s32 32, 32
          %266 = vsyncadd %s257, %s265
          %s267 = smul.addr %s26, 32
          %s268 = scalar_lea.hbm %s2, %s267
          %s270 = sshll.u32 %s260, 4
          %s271 = int_to_ptr.vmem [resolvable:$true] %s270
          %273 = dma.vmem_to_hbm [thread:$0]  %s271, 32, %s268, %s257
        $region48: #{tpu_custom_call.1} parent=27 // pred_fallthru
          _
      $region28: #{tpu_custom_call.1} parent=5 // pred_fallthru
        _
      %p274 = scmp.le.s32.totalorder 2, %s17
      // Predicated region
      $region49: #{tpu_custom_call.1} parent=5 // pred_check
        %p275 = pneg %p274
      $region50: #{tpu_custom_call.1} parent=5 // pred_check_branch
        %277 = sbr.rel (%p275) target = $region52
      $region51: #{tpu_custom_call.1} parent=5 // pred_region
        %s278 = ssub.s32 %s17, 2
        // Predicated region
        $region53: #{tpu_custom_call.1} parent=51 // pred_check
          %p279 = pneg %p114
        $region54: #{tpu_custom_call.1} parent=51 // pred_check_branch
          %281 = sbr.rel (%p279) target = $region56
        $region55: #{tpu_custom_call.1} parent=51 // pred_region
          %s282 = sand.u32 %s99, 1
          %s283 = scalar_lea.sflag [#allocation5], %s282
          %s284 = sand.u32 %s99, 1
          %s285 = smul.addr %s284, 2
          %s286 = scalar_lea.vmem [#allocation8], %s285
          %287 = dma.done %s283, 32
        $region56: #{tpu_custom_call.1} parent=51 // pred_fallthru
          _
      $region52: #{tpu_custom_call.1} parent=5 // pred_fallthru
        _
    $region6: #{tpu_custom_call.1} parent=1 // loop_footer
      %s21 = sadd.s32 1, %s17
    $region7: #{tpu_custom_call.1} parent=1 // loop_footer_branch
      %16 = sbr.rel target = $region3
    $region8: #{tpu_custom_call.1} parent=1 // loop_exit
      _
    %288 = vsyncpa [#allocation4], 1
    %s289 = scalar_lea.sflag [#allocation4], 1
    %290 = vsyncpa %s289, 1
    %291 = vsyncpa [#allocation7], 1
    %s292 = scalar_lea.sflag [#allocation7], 1
    %293 = vsyncpa %s292, 1
    %294 = vsyncpa [#allocation5], 1
    %s295 = scalar_lea.sflag [#allocation5], 1
    %296 = vsyncpa %s295, 1

</llo_original>
